<compile_context>
chip_gen: v7x
topology: tpu7x:2x2x1
jax: 0.10.0
libtpu: 0.0.40
codegen_flags: <defaults>
</compile_context>

<pallas_src>
import math

import jax
import jax.numpy as jnp
from jax.experimental import pallas as pl
from jax.experimental.pallas import tpu as pltpu

_TARGET_CHUNK_BYTES = 8 * 1024 * 1024  # aim for ~8 MiB per DMA on big arrays
_MAX_CHUNKS = 8                        # cap on simultaneously outstanding DMAs


def _row_chunks(rows, flat, itemsize):
    """Static (row_start, row_count) chunks, sublane-aligned per dtype."""
    sub = max(8, 32 // itemsize)       # 8 rows f32, 16 bf16/fp16, 32 int8/fp8
    total_bytes = rows * flat * itemsize
    n_chunks = max(1, min(_MAX_CHUNKS, -(-total_bytes // _TARGET_CHUNK_BYTES)))
    if n_chunks <= 1 or rows < 2 * sub:
        return [(0, rows)]             # single full-array DMA
    per = -(-rows // n_chunks)
    per = -(-per // sub) * sub         # round chunk size up to sublane multiple
    chunks = []
    r = 0
    while r < rows:
        rn = min(per, rows - r)
        chunks.append((r, rn))
        r += rn
    return chunks


def _make_dma_copy_kernel(chunks, rows):
    single_full = len(chunks) == 1 and chunks[0] == (0, rows)

    def kernel(x_hbm, o_hbm, sem):
        # Pure DMA memcpy: start all chunk DMAs (multiple outstanding), then
        # wait on all of them. No TensorCore compute, no VMEM staging.
        copies = []
        for c, (r0, rn) in enumerate(chunks):
            if single_full:
                src, dst = x_hbm, o_hbm
            else:
                src = x_hbm.at[pl.ds(r0, rn), :]
                dst = o_hbm.at[pl.ds(r0, rn), :]
            cp = pltpu.make_async_copy(src, dst, sem.at[c])
            cp.start()
            copies.append(cp)
        for cp in copies:
            cp.wait()

    return kernel


def flatten(x, dim: int = 1):
    """Pallas equivalent of torch.flatten(x, start_dim=dim)."""
    if dim < 0:                         # torch allows negative start_dim
        dim += x.ndim
    assert 0 <= dim < x.ndim
    lead = x.shape[:dim]
    rows = math.prod(lead) if lead else 1
    flat = math.prod(x.shape[dim:])
    itemsize = jnp.dtype(x.dtype).itemsize

    # Metadata-only re-layout in the wrapper (contiguous row-major flatten).
    x2 = x.reshape(rows, flat)

    chunks = _row_chunks(rows, flat, itemsize)

    out2 = pl.pallas_call(
        _make_dma_copy_kernel(chunks, rows),
        out_shape=jax.ShapeDtypeStruct((rows, flat), x.dtype),
        grid_spec=pltpu.PrefetchScalarGridSpec(
            num_scalar_prefetch=0,
            grid=(1,),
            in_specs=[pl.BlockSpec(memory_space=pl.ANY)],
            out_specs=pl.BlockSpec(memory_space=pl.ANY),
            scratch_shapes=[pltpu.SemaphoreType.DMA((len(chunks),))],
        ),
        compiler_params=pltpu.CompilerParams(
            dimension_semantics=("arbitrary",),
        ),
        cost_estimate=pl.CostEstimate(
            flops=0,
            transcendentals=0,
            bytes_accessed=2 * rows * flat * itemsize,
        ),
    )(x2)

    # Restore the leading (non-flattened) dims; torch.flatten keeps dims [0, dim).
    return out2.reshape(lead + (flat,))


if __name__ == "__main__":
    key = jax.random.PRNGKey(0)

    # Main case: small NCHW input, default start_dim=1 (the module's default).
    x = jax.random.normal(key, (2, 4, 16, 16), dtype=jnp.float32)
    out = jax.block_until_ready(flatten(x, dim=1))
    ref = x.reshape(x.shape[0], -1)
    assert out.shape == (2, 4 * 16 * 16), out.shape
    assert out.dtype == x.dtype
    assert jnp.array_equal(out, ref), "mismatch vs reference flatten (f32)"

    # Second case: batch >= 8 and bf16 dtype (dtype-aware sublane path).
    x2 = jax.random.normal(jax.random.PRNGKey(1), (8, 8, 8, 8), dtype=jnp.bfloat16)
    out2 = jax.block_until_ready(flatten(x2, dim=1))
    ref2 = x2.reshape(x2.shape[0], -1)
    assert out2.shape == (8, 8 * 8 * 8), out2.shape
    assert out2.dtype == x2.dtype
    assert jnp.array_equal(out2, ref2), "mismatch vs reference flatten (bf16)"

    print("KERNEL_OK")
</pallas_src>

<mosaic_0001>
module attributes {stable_mosaic.version = 11 : i64} {
  func.func @kernel(%arg0: i32, %arg1: memref<2x1024xf32, #tpu.memory_space<any>>, %arg2: memref<2x1024xf32, #tpu.memory_space<any>>, %arg3: memref<1x!tpu.dma_semaphore, #tpu.memory_space<semaphore_mem>>) attributes {dimension_semantics = [#tpu.dimension_semantics<arbitrary>], iteration_bounds = array<i64: 1>, scalar_prefetch = 0 : i64, scratch_operands = 1 : i64, tpu.core_type = #tpu.core_type<tc>, window_params = [{}, {}]} {
    %c0_i32 = arith.constant 0 : i32
    %0 = tpu.memref_slice %arg3[%c0_i32] : memref<1x!tpu.dma_semaphore, #tpu.memory_space<semaphore_mem>> -> memref<1x!tpu.dma_semaphore, #tpu.memory_space<semaphore_mem>>
    %1 = tpu.memref_squeeze %0 : memref<1x!tpu.dma_semaphore, #tpu.memory_space<semaphore_mem>> -> memref<!tpu.dma_semaphore, #tpu.memory_space<semaphore_mem>>
    tpu.enqueue_dma source(%arg1 : memref<2x1024xf32, #tpu.memory_space<any>>) target(%arg2 : memref<2x1024xf32, #tpu.memory_space<any>>) target_semaphore(%1 : memref<!tpu.dma_semaphore, #tpu.memory_space<semaphore_mem>>)
    %c0_i32_0 = arith.constant 0 : i32
    %2 = tpu.memref_slice %arg3[%c0_i32_0] : memref<1x!tpu.dma_semaphore, #tpu.memory_space<semaphore_mem>> -> memref<1x!tpu.dma_semaphore, #tpu.memory_space<semaphore_mem>>
    %3 = tpu.memref_squeeze %2 : memref<1x!tpu.dma_semaphore, #tpu.memory_space<semaphore_mem>> -> memref<!tpu.dma_semaphore, #tpu.memory_space<semaphore_mem>>
    tpu.wait_dma2 semaphore(%3 : memref<!tpu.dma_semaphore, #tpu.memory_space<semaphore_mem>>) src(%arg1 : memref<2x1024xf32, #tpu.memory_space<any>>) dst(%arg2 : memref<2x1024xf32, #tpu.memory_space<any>>)
    return
  }
}

</mosaic_0001>

<llo_original>
// kernel: tpu_custom_call.1
$region0: #{tpu_custom_call.1}
  #allocation0 [shape = 'u32[]', space=smem, size = 0x4, offset = 0x4, fixed_abs, tag = 'smem constant byte address 0x4 - core index']
  #allocation1 [shape = 'u32[144,128]{1,0:T(1,128)}', space=vmem, size = 0x12000, scoped, tag = 'internal scratch']
  #allocation2 [shape = 's32[1]{0}', space=sflag, size = 0x4, scoped, tag = 'scratch operand']
  #allocation3 [shape = 's32[]', space=sflag, size = 0x4, offset = 0, fixed_abs, tag = 'sflag constant byte address 0x0 - dummy sync flag']
  #allocation4 [shape = 'u32[0]{0}', space=smem, size = 0, offset = 0, fixed_abs, tag = 'smem constant byte address 0x0 - null']
  %s0 = inlined_call_operand.hbm [shape: f32[2,1024], index: 0, kind: input, shape index: {}]
  %s1 = inlined_call_operand.hbm [shape: f32[2,1024], index: 1, kind: output, shape index: {}]
  %s2 = sld [smem:[#allocation0]]
  $region2: #{tpu_custom_call.1} parent=0
    _
  %s4 = ssub.s32 1, %s2
  %s5 = scalar_select 0, %s4, %s2
  %s7 = sshll.u32 1, 14
  %s8 = sxor.u32 4294967295, %s7
  %s11 = sshll.u32 3, 24
  %s12 = sxor.u32 4294967295, %s11
  %s13 = sand.u32 0, %s12
  %s15 = sor.u32 %s13, 0
  %18 = dma.general %s0, 256, %s1, [#allocation2], [#allocation3], [#allocation4], %s15, 0
  %s19 = smul.u32 2, 1
  %s20 = smul.u32 %s19, 8
  %s21 = sshll.u32 %s20, 4
  %22 = dma.done [#allocation2], %s21
  %23 = vsyncmov [#allocation2]
  %s24 = vpop.sfrf %23
  %p25 = scmp.eq.s32.totalorder %s24, 0
  %p26 = pneg %p25
  %28 = shalt.err (%p26)

</llo_original>
